<compile_context>
chip_gen: v5e
topology: v5e:2x2
jax: 0.10.0
libtpu: 0.0.40
codegen_flags: <defaults>
</compile_context>

<pallas_src>
import functools

import jax
import jax.numpy as jnp
from jax import lax
from jax.experimental import pallas as pl
from jax.experimental.pallas import tpu as pltpu


def _lstm_kernel(pre_ref, wh_ref, h0_ref, c0_ref, hid_ref, h_sc, c_sc, *,
                 unroll):
    """One grid step processes `chunk` = pre_ref.shape[0] serial LSTM steps.

    pre_ref : (chunk, 4*dim)   pre-gates x@Wx^T + b (sigmoid lanes pre-scaled by 0.5)
    wh_ref  : (dim, 4*dim)     fused Wh^T (sigmoid lanes pre-scaled by 0.5)
    hid_ref : (chunk//4, 4*dim) lane-packed hidden states (4 timesteps per row)
    h_sc/c_sc : (1, dim) VMEM scratch carrying LSTM state across grid steps
    """
    dim = wh_ref.shape[0]
    chunk = pre_ref.shape[0]
    groups = chunk // 4

    @pl.when(pl.program_id(0) == 0)
    def _():
        h_sc[...] = h0_ref[...]
        c_sc[...] = c0_ref[...]

    wh = wh_ref[...]                                   # hoisted out of the loop
    lane = lax.broadcasted_iota(jnp.int32, (1, 4 * dim), 1)
    is_sig = lane < 3 * dim                            # lanes [f|o|i] sigmoid, [g] tanh
    mult = jnp.where(is_sig, 0.5, 1.0)
    shift = jnp.where(is_sig, 0.5, 0.0)

    def group(r, carry):
        h, c = carry                                   # (1, dim) each
        base = pl.multiple_of(r * 4, 4)
        pre_rows = pre_ref[pl.ds(base, 4), :]          # one wide load per 4 steps
        outs = []
        for k in range(4):                             # static inner unroll
            z = jnp.dot(h, wh, preferred_element_type=jnp.float32) \
                + pre_rows[k:k + 1, :]                 # (1, 4*dim) fused gate pre-act
            act = jnp.tanh(z) * mult + shift           # one EUP pass for all gates
            f = act[:, 0 * dim:1 * dim]
            o = act[:, 1 * dim:2 * dim]
            i = act[:, 2 * dim:3 * dim]
            g = act[:, 3 * dim:4 * dim]
            c = f * c + i * g
            h = o * jnp.tanh(c)                        # second (and last) EUP pass
            outs.append(h)
        # lane-dense store: 4 timesteps packed into one (1, 4*dim) row
        hid_ref[pl.ds(r, 1), :] = jnp.concatenate(outs, axis=-1)
        return (h, c)

    h_fin, c_fin = lax.fori_loop(0, groups, group, (h_sc[...], c_sc[...]),
                                 unroll=unroll)
    h_sc[...] = h_fin
    c_sc[...] = c_fin


def lstm_forward(x, W, b, h0, c0, Wp, bp):
    """Returns (outputs, hidden_states):
       outputs:       (B, output_size)  softmax(projection(h)) per batch item
       hidden_states: (B, T, dim)       h after every time step
    """
    B, T, F = x.shape
    dim = h0.shape[0]
    BT = B * T
    four = 4 * dim

    Wh = W[:, :dim]                                    # (4*dim, dim) recurrent part
    Wx = W[:, dim:]                                    # (4*dim, F)   input part

    # Input projection hoisted off the serial path -> one fused (BT,4*dim) buffer.
    pre = jnp.dot(x.reshape(BT, F), Wx.T) + b[None, :]
    # Fold the 0.5 of sigmoid(x) = 0.5*tanh(x/2)+0.5 into the sigmoid lanes
    # (f, o, i) of both the pre-gates and the fused recurrent weight.
    lane_scale = jnp.concatenate(
        [jnp.full((3 * dim,), 0.5, jnp.float32),
         jnp.ones((dim,), jnp.float32)])[None, :]
    pre = (pre * lane_scale).astype(jnp.float32)
    WhT = (Wh.T * lane_scale).astype(jnp.float32)      # (dim, 4*dim)

    # Chunk the time axis: bounded VMEM + HBM/compute overlap for big B*T,
    # single chunk for small problems.
    if BT > 256:
        chunk = 256                                    # 64 packed output rows / chunk
    else:
        chunk = -(-BT // 4) * 4                        # single chunk, mult of 4
    bt_pad = -(-BT // chunk) * chunk
    n_chunks = bt_pad // chunk
    if bt_pad != BT:
        pre = jnp.concatenate(
            [pre, jnp.zeros((bt_pad - BT, four), jnp.float32)], axis=0)

    groups = chunk // 4
    unroll = True if groups <= 16 else 8               # bounded unroll for long chains

    kernel = functools.partial(_lstm_kernel, unroll=unroll)
    hid_packed = pl.pallas_call(
        kernel,
        out_shape=jax.ShapeDtypeStruct((bt_pad // 4, four), jnp.float32),
        grid_spec=pltpu.PrefetchScalarGridSpec(
            num_scalar_prefetch=0,
            grid=(n_chunks,),
            in_specs=[
                pl.BlockSpec((chunk, four), lambda i: (i, 0)),   # pre-gates (streamed)
                pl.BlockSpec((dim, four), lambda i: (0, 0)),     # fused Wh^T (resident)
                pl.BlockSpec((1, dim), lambda i: (0, 0)),        # h0
                pl.BlockSpec((1, dim), lambda i: (0, 0)),        # c0
            ],
            out_specs=pl.BlockSpec((chunk // 4, four), lambda i: (i, 0)),
            scratch_shapes=[pltpu.VMEM((1, dim), jnp.float32),   # h carry
                            pltpu.VMEM((1, dim), jnp.float32)],  # c carry
        ),
        compiler_params=pltpu.CompilerParams(
            dimension_semantics=("arbitrary",)),
    )(pre, WhT, h0.reshape(1, dim), c0.reshape(1, dim))

    # (bt_pad//4, 4*dim) row-major == (bt_pad, dim): unpack + drop padding.
    hid = hid_packed.reshape(bt_pad, dim)[:BT].reshape(B, T, dim)

    # Final projection + softmax (tiny) in plain JAX; XLA fuses it.
    logits = jnp.dot(hid[:, -1, :], Wp.T) + bp[None, :]
    out = jax.nn.softmax(logits, axis=-1)
    return out, hid


def lstm_reference(x, W, b, h0, c0, Wp, bp):
    """Pure-JAX replica of the PyTorch forward loop (module state carried)."""
    B, T, _ = x.shape
    dim = h0.shape[0]
    h, c = h0, c0
    outs, hids = [], []
    for i in range(B):
        row = []
        for j in range(T):
            concat = jnp.concatenate([h, x[i, j]], axis=0)
            whx = W @ concat + b
            f = jax.nn.sigmoid(whx[:dim])
            o = jax.nn.sigmoid(whx[dim:2 * dim])
            ig = jax.nn.sigmoid(whx[2 * dim:3 * dim])
            g = jnp.tanh(whx[3 * dim:])
            c = f * c + ig * g
            h = o * jnp.tanh(c)
            row.append(h)
        logits = Wp @ h + bp
        outs.append(jax.nn.softmax(logits))
        hids.append(jnp.stack(row))
    return jnp.stack(outs), jnp.stack(hids)


if __name__ == "__main__":
    dim = 32
    max_len = 8
    batch_size = 2
    output_size = 8
    feat = max_len  # W is (4*dim, max_len + dim) => per-step input has length max_len

    key = jax.random.PRNGKey(0)
    kW, kb, kh, kc, kWp, kbp, kx = jax.random.split(key, 7)

    W = jax.random.normal(kW, (4 * dim, max_len + dim), dtype=jnp.float32)
    b = jax.random.normal(kb, (4 * dim,), dtype=jnp.float32).at[:dim].set(1.0)
    h0 = jax.random.normal(kh, (dim,), dtype=jnp.float32)
    c0 = jax.random.normal(kc, (dim,), dtype=jnp.float32)
    Wp = 0.1 * jax.random.normal(kWp, (output_size, dim), dtype=jnp.float32)
    bp = 0.1 * jax.random.normal(kbp, (output_size,), dtype=jnp.float32)
    x = jax.random.normal(kx, (batch_size, max_len, feat), dtype=jnp.float32)

    out, hid = lstm_forward(x, W, b, h0, c0, Wp, bp)
    out = jax.block_until_ready(out)
    hid = jax.block_until_ready(hid)

    out_ref, hid_ref = lstm_reference(x, W, b, h0, c0, Wp, bp)
    assert jnp.allclose(out, out_ref, rtol=1e-3, atol=1e-3), "output mismatch"
    assert jnp.allclose(hid, hid_ref, rtol=1e-3, atol=1e-3), "hidden mismatch"

    print("KERNEL_OK")
</pallas_src>

<mosaic_0001>
module attributes {stable_mosaic.version = 11 : i64} {
  func.func @_lstm_kernel(%arg0: i32, %arg1: memref<16x128xf32, #tpu.memory_space<vmem>>, %arg2: memref<32x128xf32, #tpu.memory_space<vmem>>, %arg3: memref<1x32xf32, #tpu.memory_space<vmem>>, %arg4: memref<1x32xf32, #tpu.memory_space<vmem>>, %arg5: memref<4x128xf32, #tpu.memory_space<vmem>>, %arg6: memref<1x32xf32, #tpu.memory_space<vmem>>, %arg7: memref<1x32xf32, #tpu.memory_space<vmem>>) attributes {dimension_semantics = [#tpu.dimension_semantics<arbitrary>], iteration_bounds = array<i64: 1>, scalar_prefetch = 0 : i64, scratch_operands = 2 : i64, tpu.core_type = #tpu.core_type<tc>, window_params = [{transform_indices = @transform_0, window_bounds = array<i64: 16, 128>}, {pipeline_mode = #tpu.pipeline_mode<synchronous>, transform_indices = @transform_1, window_bounds = array<i64: 32, 128>}, {pipeline_mode = #tpu.pipeline_mode<synchronous>, transform_indices = @transform_2, window_bounds = array<i64: 1, 32>}, {pipeline_mode = #tpu.pipeline_mode<synchronous>, transform_indices = @transform_3, window_bounds = array<i64: 1, 32>}, {transform_indices = @transform_4, window_bounds = array<i64: 4, 128>}]} {
    %c0_i32 = arith.constant 0 : i32
    %0 = arith.cmpi eq, %arg0, %c0_i32 : i32
    %1 = arith.extui %0 : i1 to i32
    %c0_i32_0 = arith.constant 0 : i32
    %2 = arith.cmpi ne, %1, %c0_i32_0 : i32
    scf.if %2 {
      %c0_42 = arith.constant 0 : index
      %c0_43 = arith.constant 0 : index
      %285 = vector.load %arg3[%c0_42, %c0_43] : memref<1x32xf32, #tpu.memory_space<vmem>>, vector<1x32xf32>
      %c0_44 = arith.constant 0 : index
      %c0_45 = arith.constant 0 : index
      %286 = vector.load %arg6[%c0_44, %c0_45] : memref<1x32xf32, #tpu.memory_space<vmem>>, vector<1x32xf32>
      tpu.vector_store %arg6[%c0_44, %c0_45], %285 {strides = array<i32>} : memref<1x32xf32, #tpu.memory_space<vmem>>, vector<1x32xf32>,
      %c0_46 = arith.constant 0 : index
      %c0_47 = arith.constant 0 : index
      %287 = vector.load %arg4[%c0_46, %c0_47] : memref<1x32xf32, #tpu.memory_space<vmem>>, vector<1x32xf32>
      %c0_48 = arith.constant 0 : index
      %c0_49 = arith.constant 0 : index
      %288 = vector.load %arg7[%c0_48, %c0_49] : memref<1x32xf32, #tpu.memory_space<vmem>>, vector<1x32xf32>
      tpu.vector_store %arg7[%c0_48, %c0_49], %287 {strides = array<i32>} : memref<1x32xf32, #tpu.memory_space<vmem>>, vector<1x32xf32>,
    } else {
    }
    %c0 = arith.constant 0 : index
    %c0_1 = arith.constant 0 : index
    %3 = vector.load %arg2[%c0, %c0_1] : memref<32x128xf32, #tpu.memory_space<vmem>>, vector<32x128xf32>
    %4 = tpu.iota {dimensions = array<i32: 1>} : vector<1x128xi32>
    %c96_i32 = arith.constant 96 : i32
    %5 = vector.broadcast %c96_i32 : i32 to vector<1x128xi32>
    %6 = arith.cmpi slt, %4, %5 : vector<1x128xi32>
    %cst = arith.constant 5.000000e-01 : f32
    %cst_2 = arith.constant 1.000000e+00 : f32
    %7 = vector.broadcast %cst : f32 to vector<1x128xf32>
    %8 = vector.broadcast %cst_2 : f32 to vector<1x128xf32>
    %9 = arith.select %6, %7, %8 : vector<1x128xi1>, vector<1x128xf32>
    %cst_3 = arith.constant 5.000000e-01 : f32
    %cst_4 = arith.constant 0.000000e+00 : f32
    %10 = vector.broadcast %cst_3 : f32 to vector<1x128xf32>
    %11 = vector.broadcast %cst_4 : f32 to vector<1x128xf32>
    %12 = arith.select %6, %10, %11 : vector<1x128xi1>, vector<1x128xf32>
    %c0_5 = arith.constant 0 : index
    %c0_6 = arith.constant 0 : index
    %13 = vector.load %arg6[%c0_5, %c0_6] : memref<1x32xf32, #tpu.memory_space<vmem>>, vector<1x32xf32>
    %c0_7 = arith.constant 0 : index
    %c0_8 = arith.constant 0 : index
    %14 = vector.load %arg7[%c0_7, %c0_8] : memref<1x32xf32, #tpu.memory_space<vmem>>, vector<1x32xf32>
    %c0_i32_9 = arith.constant 0 : i32
    %c4_i32 = arith.constant 4 : i32
    %15 = arith.muli %c0_i32_9, %c4_i32 : i32
    %16 = tpu.assume_multiple %15, 4 : i32
    %17 = arith.index_cast %16 : i32 to index
    %c0_10 = arith.constant 0 : index
    %18 = vector.load %arg1[%17, %c0_10] : memref<16x128xf32, #tpu.memory_space<vmem>>, vector<4x128xf32>
    %cst_11 = arith.constant dense<0.000000e+00> : vector<1x128xf32>
    %19 = tpu.matmul %13, %3, %cst_11 {dimension_numbers = #tpu.dot_dimension_numbers<[1], [0], [0], [1], [0, 0, 1, 1], [], []>} : vector<1x32xf32>, vector<32x128xf32>, vector<1x128xf32> -> vector<1x128xf32>
    %20 = vector.extract_strided_slice %18 {offsets = [0, 0], sizes = [1, 128], strides = [1, 1]} : vector<4x128xf32> to vector<1x128xf32>
    %21 = arith.addf %19, %20 : vector<1x128xf32>
    %22 = math.tanh %21 : vector<1x128xf32>
    %23 = arith.mulf %22, %9 : vector<1x128xf32>
    %24 = arith.addf %23, %12 : vector<1x128xf32>
    %25 = vector.extract_strided_slice %24 {offsets = [0, 0], sizes = [1, 32], strides = [1, 1]} : vector<1x128xf32> to vector<1x32xf32>
    %26 = vector.extract_strided_slice %24 {offsets = [0, 32], sizes = [1, 32], strides = [1, 1]} : vector<1x128xf32> to vector<1x32xf32>
    %27 = vector.extract_strided_slice %24 {offsets = [0, 64], sizes = [1, 32], strides = [1, 1]} : vector<1x128xf32> to vector<1x32xf32>
    %28 = vector.extract_strided_slice %24 {offsets = [0, 96], sizes = [1, 32], strides = [1, 1]} : vector<1x128xf32> to vector<1x32xf32>
    %29 = arith.mulf %25, %14 : vector<1x32xf32>
    %30 = arith.mulf %27, %28 : vector<1x32xf32>
    %31 = arith.addf %29, %30 : vector<1x32xf32>
    %32 = math.tanh %31 : vector<1x32xf32>
    %33 = arith.mulf %26, %32 : vector<1x32xf32>
    %cst_12 = arith.constant dense<0.000000e+00> : vector<1x128xf32>
    %34 = tpu.matmul %33, %3, %cst_12 {dimension_numbers = #tpu.dot_dimension_numbers<[1], [0], [0], [1], [0, 0, 1, 1], [], []>} : vector<1x32xf32>, vector<32x128xf32>, vector<1x128xf32> -> vector<1x128xf32>
    %35 = vector.extract_strided_slice %18 {offsets = [1, 0], sizes = [1, 128], strides = [1, 1]} : vector<4x128xf32> to vector<1x128xf32>
    %36 = arith.addf %34, %35 : vector<1x128xf32>
    %37 = math.tanh %36 : vector<1x128xf32>
    %38 = arith.mulf %37, %9 : vector<1x128xf32>
    %39 = arith.addf %38, %12 : vector<1x128xf32>
    %40 = vector.extract_strided_slice %39 {offsets = [0, 0], sizes = [1, 32], strides = [1, 1]} : vector<1x128xf32> to vector<1x32xf32>
    %41 = vector.extract_strided_slice %39 {offsets = [0, 32], sizes = [1, 32], strides = [1, 1]} : vector<1x128xf32> to vector<1x32xf32>
    %42 = vector.extract_strided_slice %39 {offsets = [0, 64], sizes = [1, 32], strides = [1, 1]} : vector<1x128xf32> to vector<1x32xf32>
    %43 = vector.extract_strided_slice %39 {offsets = [0, 96], sizes = [1, 32], strides = [1, 1]} : vector<1x128xf32> to vector<1x32xf32>
    %44 = arith.mulf %40, %31 : vector<1x32xf32>
    %45 = arith.mulf %42, %43 : vector<1x32xf32>
    %46 = arith.addf %44, %45 : vector<1x32xf32>
    %47 = math.tanh %46 : vector<1x32xf32>
    %48 = arith.mulf %41, %47 : vector<1x32xf32>
    %cst_13 = arith.constant dense<0.000000e+00> : vector<1x128xf32>
    %49 = tpu.matmul %48, %3, %cst_13 {dimension_numbers = #tpu.dot_dimension_numbers<[1], [0], [0], [1], [0, 0, 1, 1], [], []>} : vector<1x32xf32>, vector<32x128xf32>, vector<1x128xf32> -> vector<1x128xf32>
    %50 = vector.extract_strided_slice %18 {offsets = [2, 0], sizes = [1, 128], strides = [1, 1]} : vector<4x128xf32> to vector<1x128xf32>
    %51 = arith.addf %49, %50 : vector<1x128xf32>
    %52 = math.tanh %51 : vector<1x128xf32>
    %53 = arith.mulf %52, %9 : vector<1x128xf32>
    %54 = arith.addf %53, %12 : vector<1x128xf32>
    %55 = vector.extract_strided_slice %54 {offsets = [0, 0], sizes = [1, 32], strides = [1, 1]} : vector<1x128xf32> to vector<1x32xf32>
    %56 = vector.extract_strided_slice %54 {offsets = [0, 32], sizes = [1, 32], strides = [1, 1]} : vector<1x128xf32> to vector<1x32xf32>
    %57 = vector.extract_strided_slice %54 {offsets = [0, 64], sizes = [1, 32], strides = [1, 1]} : vector<1x128xf32> to vector<1x32xf32>
    %58 = vector.extract_strided_slice %54 {offsets = [0, 96], sizes = [1, 32], strides = [1, 1]} : vector<1x128xf32> to vector<1x32xf32>
    %59 = arith.mulf %55, %46 : vector<1x32xf32>
    %60 = arith.mulf %57, %58 : vector<1x32xf32>
    %61 = arith.addf %59, %60 : vector<1x32xf32>
    %62 = math.tanh %61 : vector<1x32xf32>
    %63 = arith.mulf %56, %62 : vector<1x32xf32>
    %cst_14 = arith.constant dense<0.000000e+00> : vector<1x128xf32>
    %64 = tpu.matmul %63, %3, %cst_14 {dimension_numbers = #tpu.dot_dimension_numbers<[1], [0], [0], [1], [0, 0, 1, 1], [], []>} : vector<1x32xf32>, vector<32x128xf32>, vector<1x128xf32> -> vector<1x128xf32>
    %65 = vector.extract_strided_slice %18 {offsets = [3, 0], sizes = [1, 128], strides = [1, 1]} : vector<4x128xf32> to vector<1x128xf32>
    %66 = arith.addf %64, %65 : vector<1x128xf32>
    %67 = math.tanh %66 : vector<1x128xf32>
    %68 = arith.mulf %67, %9 : vector<1x128xf32>
    %69 = arith.addf %68, %12 : vector<1x128xf32>
    %70 = vector.extract_strided_slice %69 {offsets = [0, 0], sizes = [1, 32], strides = [1, 1]} : vector<1x128xf32> to vector<1x32xf32>
    %71 = vector.extract_strided_slice %69 {offsets = [0, 32], sizes = [1, 32], strides = [1, 1]} : vector<1x128xf32> to vector<1x32xf32>
    %72 = vector.extract_strided_slice %69 {offsets = [0, 64], sizes = [1, 32], strides = [1, 1]} : vector<1x128xf32> to vector<1x32xf32>
    %73 = vector.extract_strided_slice %69 {offsets = [0, 96], sizes = [1, 32], strides = [1, 1]} : vector<1x128xf32> to vector<1x32xf32>
    %74 = arith.mulf %70, %61 : vector<1x32xf32>
    %75 = arith.mulf %72, %73 : vector<1x32xf32>
    %76 = arith.addf %74, %75 : vector<1x32xf32>
    %77 = math.tanh %76 : vector<1x32xf32>
    %78 = arith.mulf %71, %77 : vector<1x32xf32>
    %79 = tpu.concatenate %33, %48, %63, %78 in 1 : vector<1x32xf32>, vector<1x32xf32>, vector<1x32xf32>, vector<1x32xf32> -> vector<1x128xf32>
    %80 = arith.index_cast %c0_i32_9 : i32 to index
    %c0_15 = arith.constant 0 : index
    %81 = vector.load %arg5[%80, %c0_15] : memref<4x128xf32, #tpu.memory_space<vmem>>, vector<1x128xf32>
    tpu.vector_store %arg5[%80, %c0_15], %79 {strides = array<i32>} : memref<4x128xf32, #tpu.memory_space<vmem>>, vector<1x128xf32>,
    %c1_i32 = arith.constant 1 : i32
    %c4_i32_16 = arith.constant 4 : i32
    %82 = arith.muli %c1_i32, %c4_i32_16 : i32
    %83 = tpu.assume_multiple %82, 4 : i32
    %84 = arith.index_cast %83 : i32 to index
    %c0_17 = arith.constant 0 : index
    %85 = vector.load %arg1[%84, %c0_17] : memref<16x128xf32, #tpu.memory_space<vmem>>, vector<4x128xf32>
    %cst_18 = arith.constant dense<0.000000e+00> : vector<1x128xf32>
    %86 = tpu.matmul %78, %3, %cst_18 {dimension_numbers = #tpu.dot_dimension_numbers<[1], [0], [0], [1], [0, 0, 1, 1], [], []>} : vector<1x32xf32>, vector<32x128xf32>, vector<1x128xf32> -> vector<1x128xf32>
    %87 = vector.extract_strided_slice %85 {offsets = [0, 0], sizes = [1, 128], strides = [1, 1]} : vector<4x128xf32> to vector<1x128xf32>
    %88 = arith.addf %86, %87 : vector<1x128xf32>
    %89 = math.tanh %88 : vector<1x128xf32>
    %90 = arith.mulf %89, %9 : vector<1x128xf32>
    %91 = arith.addf %90, %12 : vector<1x128xf32>
    %92 = vector.extract_strided_slice %91 {offsets = [0, 0], sizes = [1, 32], strides = [1, 1]} : vector<1x128xf32> to vector<1x32xf32>
    %93 = vector.extract_strided_slice %91 {offsets = [0, 32], sizes = [1, 32], strides = [1, 1]} : vector<1x128xf32> to vector<1x32xf32>
    %94 = vector.extract_strided_slice %91 {offsets = [0, 64], sizes = [1, 32], strides = [1, 1]} : vector<1x128xf32> to vector<1x32xf32>
    %95 = vector.extract_strided_slice %91 {offsets = [0, 96], sizes = [1, 32], strides = [1, 1]} : vector<1x128xf32> to vector<1x32xf32>
    %96 = arith.mulf %92, %76 : vector<1x32xf32>
    %97 = arith.mulf %94, %95 : vector<1x32xf32>
    %98 = arith.addf %96, %97 : vector<1x32xf32>
    %99 = math.tanh %98 : vector<1x32xf32>
    %100 = arith.mulf %93, %99 : vector<1x32xf32>
    %cst_19 = arith.constant dense<0.000000e+00> : vector<1x128xf32>
    %101 = tpu.matmul %100, %3, %cst_19 {dimension_numbers = #tpu.dot_dimension_numbers<[1], [0], [0], [1], [0, 0, 1, 1], [], []>} : vector<1x32xf32>, vector<32x128xf32>, vector<1x128xf32> -> vector<1x128xf32>
    %102 = vector.extract_strided_slice %85 {offsets = [1, 0], sizes = [1, 128], strides = [1, 1]} : vector<4x128xf32> to vector<1x128xf32>
    %103 = arith.addf %101, %102 : vector<1x128xf32>
    %104 = math.tanh %103 : vector<1x128xf32>
    %105 = arith.mulf %104, %9 : vector<1x128xf32>
    %106 = arith.addf %105, %12 : vector<1x128xf32>
    %107 = vector.extract_strided_slice %106 {offsets = [0, 0], sizes = [1, 32], strides = [1, 1]} : vector<1x128xf32> to vector<1x32xf32>
    %108 = vector.extract_strided_slice %106 {offsets = [0, 32], sizes = [1, 32], strides = [1, 1]} : vector<1x128xf32> to vector<1x32xf32>
    %109 = vector.extract_strided_slice %106 {offsets = [0, 64], sizes = [1, 32], strides = [1, 1]} : vector<1x128xf32> to vector<1x32xf32>
    %110 = vector.extract_strided_slice %106 {offsets = [0, 96], sizes = [1, 32], strides = [1, 1]} : vector<1x128xf32> to vector<1x32xf32>
    %111 = arith.mulf %107, %98 : vector<1x32xf32>
    %112 = arith.mulf %109, %110 : vector<1x32xf32>
    %113 = arith.addf %111, %112 : vector<1x32xf32>
    %114 = math.tanh %113 : vector<1x32xf32>
    %115 = arith.mulf %108, %114 : vector<1x32xf32>
    %cst_20 = arith.constant dense<0.000000e+00> : vector<1x128xf32>
    %116 = tpu.matmul %115, %3, %cst_20 {dimension_numbers = #tpu.dot_dimension_numbers<[1], [0], [0], [1], [0, 0, 1, 1], [], []>} : vector<1x32xf32>, vector<32x128xf32>, vector<1x128xf32> -> vector<1x128xf32>
    %117 = vector.extract_strided_slice %85 {offsets = [2, 0], sizes = [1, 128], strides = [1, 1]} : vector<4x128xf32> to vector<1x128xf32>
    %118 = arith.addf %116, %117 : vector<1x128xf32>
    %119 = math.tanh %118 : vector<1x128xf32>
    %120 = arith.mulf %119, %9 : vector<1x128xf32>
    %121 = arith.addf %120, %12 : vector<1x128xf32>
    %122 = vector.extract_strided_slice %121 {offsets = [0, 0], sizes = [1, 32], strides = [1, 1]} : vector<1x128xf32> to vector<1x32xf32>
    %123 = vector.extract_strided_slice %121 {offsets = [0, 32], sizes = [1, 32], strides = [1, 1]} : vector<1x128xf32> to vector<1x32xf32>
    %124 = vector.extract_strided_slice %121 {offsets = [0, 64], sizes = [1, 32], strides = [1, 1]} : vector<1x128xf32> to vector<1x32xf32>
    %125 = vector.extract_strided_slice %121 {offsets = [0, 96], sizes = [1, 32], strides = [1, 1]} : vector<1x128xf32> to vector<1x32xf32>
    %126 = arith.mulf %122, %113 : vector<1x32xf32>
    %127 = arith.mulf %124, %125 : vector<1x32xf32>
    %128 = arith.addf %126, %127 : vector<1x32xf32>
    %129 = math.tanh %128 : vector<1x32xf32>
    %130 = arith.mulf %123, %129 : vector<1x32xf32>
    %cst_21 = arith.constant dense<0.000000e+00> : vector<1x128xf32>
    %131 = tpu.matmul %130, %3, %cst_21 {dimension_numbers = #tpu.dot_dimension_numbers<[1], [0], [0], [1], [0, 0, 1, 1], [], []>} : vector<1x32xf32>, vector<32x128xf32>, vector<1x128xf32> -> vector<1x128xf32>
    %132 = vector.extract_strided_slice %85 {offsets = [3, 0], sizes = [1, 128], strides = [1, 1]} : vector<4x128xf32> to vector<1x128xf32>
    %133 = arith.addf %131, %132 : vector<1x128xf32>
    %134 = math.tanh %133 : vector<1x128xf32>
    %135 = arith.mulf %134, %9 : vector<1x128xf32>
    %136 = arith.addf %135, %12 : vector<1x128xf32>
    %137 = vector.extract_strided_slice %136 {offsets = [0, 0], sizes = [1, 32], strides = [1, 1]} : vector<1x128xf32> to vector<1x32xf32>
    %138 = vector.extract_strided_slice %136 {offsets = [0, 32], sizes = [1, 32], strides = [1, 1]} : vector<1x128xf32> to vector<1x32xf32>
    %139 = vector.extract_strided_slice %136 {offsets = [0, 64], sizes = [1, 32], strides = [1, 1]} : vector<1x128xf32> to vector<1x32xf32>
    %140 = vector.extract_strided_slice %136 {offsets = [0, 96], sizes = [1, 32], strides = [1, 1]} : vector<1x128xf32> to vector<1x32xf32>
    %141 = arith.mulf %137, %128 : vector<1x32xf32>
    %142 = arith.mulf %139, %140 : vector<1x32xf32>
    %143 = arith.addf %141, %142 : vector<1x32xf32>
    %144 = math.tanh %143 : vector<1x32xf32>
    %145 = arith.mulf %138, %144 : vector<1x32xf32>
    %146 = tpu.concatenate %100, %115, %130, %145 in 1 : vector<1x32xf32>, vector<1x32xf32>, vector<1x32xf32>, vector<1x32xf32> -> vector<1x128xf32>
    %147 = arith.index_cast %c1_i32 : i32 to index
    %c0_22 = arith.constant 0 : index
    %148 = vector.load %arg5[%147, %c0_22] : memref<4x128xf32, #tpu.memory_space<vmem>>, vector<1x128xf32>
    tpu.vector_store %arg5[%147, %c0_22], %146 {strides = array<i32>} : memref<4x128xf32, #tpu.memory_space<vmem>>, vector<1x128xf32>,
    %c2_i32 = arith.constant 2 : i32
    %c4_i32_23 = arith.constant 4 : i32
    %149 = arith.muli %c2_i32, %c4_i32_23 : i32
    %150 = tpu.assume_multiple %149, 4 : i32
    %151 = arith.index_cast %150 : i32 to index
    %c0_24 = arith.constant 0 : index
    %152 = vector.load %arg1[%151, %c0_24] : memref<16x128xf32, #tpu.memory_space<vmem>>, vector<4x128xf32>
    %cst_25 = arith.constant dense<0.000000e+00> : vector<1x128xf32>
    %153 = tpu.matmul %145, %3, %cst_25 {dimension_numbers = #tpu.dot_dimension_numbers<[1], [0], [0], [1], [0, 0, 1, 1], [], []>} : vector<1x32xf32>, vector<32x128xf32>, vector<1x128xf32> -> vector<1x128xf32>
    %154 = vector.extract_strided_slice %152 {offsets = [0, 0], sizes = [1, 128], strides = [1, 1]} : vector<4x128xf32> to vector<1x128xf32>
    %155 = arith.addf %153, %154 : vector<1x128xf32>
    %156 = math.tanh %155 : vector<1x128xf32>
    %157 = arith.mulf %156, %9 : vector<1x128xf32>
    %158 = arith.addf %157, %12 : vector<1x128xf32>
    %159 = vector.extract_strided_slice %158 {offsets = [0, 0], sizes = [1, 32], strides = [1, 1]} : vector<1x128xf32> to vector<1x32xf32>
    %160 = vector.extract_strided_slice %158 {offsets = [0, 32], sizes = [1, 32], strides = [1, 1]} : vector<1x128xf32> to vector<1x32xf32>
    %161 = vector.extract_strided_slice %158 {offsets = [0, 64], sizes = [1, 32], strides = [1, 1]} : vector<1x128xf32> to vector<1x32xf32>
    %162 = vector.extract_strided_slice %158 {offsets = [0, 96], sizes = [1, 32], strides = [1, 1]} : vector<1x128xf32> to vector<1x32xf32>
    %163 = arith.mulf %159, %143 : vector<1x32xf32>
    %164 = arith.mulf %161, %162 : vector<1x32xf32>
    %165 = arith.addf %163, %164 : vector<1x32xf32>
    %166 = math.tanh %165 : vector<1x32xf32>
    %167 = arith.mulf %160, %166 : vector<1x32xf32>
    %cst_26 = arith.constant dense<0.000000e+00> : vector<1x128xf32>
    %168 = tpu.matmul %167, %3, %cst_26 {dimension_numbers = #tpu.dot_dimension_numbers<[1], [0], [0], [1], [0, 0, 1, 1], [], []>} : vector<1x32xf32>, vector<32x128xf32>, vector<1x128xf32> -> vector<1x128xf32>
    %169 = vector.extract_strided_slice %152 {offsets = [1, 0], sizes = [1, 128], strides = [1, 1]} : vector<4x128xf32> to vector<1x128xf32>
    %170 = arith.addf %168, %169 : vector<1x128xf32>
    %171 = math.tanh %170 : vector<1x128xf32>
    %172 = arith.mulf %171, %9 : vector<1x128xf32>
    %173 = arith.addf %172, %12 : vector<1x128xf32>
    %174 = vector.extract_strided_slice %173 {offsets = [0, 0], sizes = [1, 32], strides = [1, 1]} : vector<1x128xf32> to vector<1x32xf32>
    %175 = vector.extract_strided_slice %173 {offsets = [0, 32], sizes = [1, 32], strides = [1, 1]} : vector<1x128xf32> to vector<1x32xf32>
    %176 = vector.extract_strided_slice %173 {offsets = [0, 64], sizes = [1, 32], strides = [1, 1]} : vector<1x128xf32> to vector<1x32xf32>
    %177 = vector.extract_strided_slice %173 {offsets = [0, 96], sizes = [1, 32], strides = [1, 1]} : vector<1x128xf32> to vector<1x32xf32>
    %178 = arith.mulf %174, %165 : vector<1x32xf32>
    %179 = arith.mulf %176, %177 : vector<1x32xf32>
    %180 = arith.addf %178, %179 : vector<1x32xf32>
    %181 = math.tanh %180 : vector<1x32xf32>
    %182 = arith.mulf %175, %181 : vector<1x32xf32>
    %cst_27 = arith.constant dense<0.000000e+00> : vector<1x128xf32>
    %183 = tpu.matmul %182, %3, %cst_27 {dimension_numbers = #tpu.dot_dimension_numbers<[1], [0], [0], [1], [0, 0, 1, 1], [], []>} : vector<1x32xf32>, vector<32x128xf32>, vector<1x128xf32> -> vector<1x128xf32>
    %184 = vector.extract_strided_slice %152 {offsets = [2, 0], sizes = [1, 128], strides = [1, 1]} : vector<4x128xf32> to vector<1x128xf32>
    %185 = arith.addf %183, %184 : vector<1x128xf32>
    %186 = math.tanh %185 : vector<1x128xf32>
    %187 = arith.mulf %186, %9 : vector<1x128xf32>
    %188 = arith.addf %187, %12 : vector<1x128xf32>
    %189 = vector.extract_strided_slice %188 {offsets = [0, 0], sizes = [1, 32], strides = [1, 1]} : vector<1x128xf32> to vector<1x32xf32>
    %190 = vector.extract_strided_slice %188 {offsets = [0, 32], sizes = [1, 32], strides = [1, 1]} : vector<1x128xf32> to vector<1x32xf32>
    %191 = vector.extract_strided_slice %188 {offsets = [0, 64], sizes = [1, 32], strides = [1, 1]} : vector<1x128xf32> to vector<1x32xf32>
    %192 = vector.extract_strided_slice %188 {offsets = [0, 96], sizes = [1, 32], strides = [1, 1]} : vector<1x128xf32> to vector<1x32xf32>
    %193 = arith.mulf %189, %180 : vector<1x32xf32>
    %194 = arith.mulf %191, %192 : vector<1x32xf32>
    %195 = arith.addf %193, %194 : vector<1x32xf32>
    %196 = math.tanh %195 : vector<1x32xf32>
    %197 = arith.mulf %190, %196 : vector<1x32xf32>
    %cst_28 = arith.constant dense<0.000000e+00> : vector<1x128xf32>
    %198 = tpu.matmul %197, %3, %cst_28 {dimension_numbers = #tpu.dot_dimension_numbers<[1], [0], [0], [1], [0, 0, 1, 1], [], []>} : vector<1x32xf32>, vector<32x128xf32>, vector<1x128xf32> -> vector<1x128xf32>
    %199 = vector.extract_strided_slice %152 {offsets = [3, 0], sizes = [1, 128], strides = [1, 1]} : vector<4x128xf32> to vector<1x128xf32>
    %200 = arith.addf %198, %199 : vector<1x128xf32>
    %201 = math.tanh %200 : vector<1x128xf32>
    %202 = arith.mulf %201, %9 : vector<1x128xf32>
    %203 = arith.addf %202, %12 : vector<1x128xf32>
    %204 = vector.extract_strided_slice %203 {offsets = [0, 0], sizes = [1, 32], strides = [1, 1]} : vector<1x128xf32> to vector<1x32xf32>
    %205 = vector.extract_strided_slice %203 {offsets = [0, 32], sizes = [1, 32], strides = [1, 1]} : vector<1x128xf32> to vector<1x32xf32>
    %206 = vector.extract_strided_slice %203 {offsets = [0, 64], sizes = [1, 32], strides = [1, 1]} : vector<1x128xf32> to vector<1x32xf32>
    %207 = vector.extract_strided_slice %203 {offsets = [0, 96], sizes = [1, 32], strides = [1, 1]} : vector<1x128xf32> to vector<1x32xf32>
    %208 = arith.mulf %204, %195 : vector<1x32xf32>
    %209 = arith.mulf %206, %207 : vector<1x32xf32>
    %210 = arith.addf %208, %209 : vector<1x32xf32>
    %211 = math.tanh %210 : vector<1x32xf32>
    %212 = arith.mulf %205, %211 : vector<1x32xf32>
    %213 = tpu.concatenate %167, %182, %197, %212 in 1 : vector<1x32xf32>, vector<1x32xf32>, vector<1x32xf32>, vector<1x32xf32> -> vector<1x128xf32>
    %214 = arith.index_cast %c2_i32 : i32 to index
    %c0_29 = arith.constant 0 : index
    %215 = vector.load %arg5[%214, %c0_29] : memref<4x128xf32, #tpu.memory_space<vmem>>, vector<1x128xf32>
    tpu.vector_store %arg5[%214, %c0_29], %213 {strides = array<i32>} : memref<4x128xf32, #tpu.memory_space<vmem>>, vector<1x128xf32>,
    %c3_i32 = arith.constant 3 : i32
    %c4_i32_30 = arith.constant 4 : i32
    %216 = arith.muli %c3_i32, %c4_i32_30 : i32
    %217 = tpu.assume_multiple %216, 4 : i32
    %218 = arith.index_cast %217 : i32 to index
    %c0_31 = arith.constant 0 : index
    %219 = vector.load %arg1[%218, %c0_31] : memref<16x128xf32, #tpu.memory_space<vmem>>, vector<4x128xf32>
    %cst_32 = arith.constant dense<0.000000e+00> : vector<1x128xf32>
    %220 = tpu.matmul %212, %3, %cst_32 {dimension_numbers = #tpu.dot_dimension_numbers<[1], [0], [0], [1], [0, 0, 1, 1], [], []>} : vector<1x32xf32>, vector<32x128xf32>, vector<1x128xf32> -> vector<1x128xf32>
    %221 = vector.extract_strided_slice %219 {offsets = [0, 0], sizes = [1, 128], strides = [1, 1]} : vector<4x128xf32> to vector<1x128xf32>
    %222 = arith.addf %220, %221 : vector<1x128xf32>
    %223 = math.tanh %222 : vector<1x128xf32>
    %224 = arith.mulf %223, %9 : vector<1x128xf32>
    %225 = arith.addf %224, %12 : vector<1x128xf32>
    %226 = vector.extract_strided_slice %225 {offsets = [0, 0], sizes = [1, 32], strides = [1, 1]} : vector<1x128xf32> to vector<1x32xf32>
    %227 = vector.extract_strided_slice %225 {offsets = [0, 32], sizes = [1, 32], strides = [1, 1]} : vector<1x128xf32> to vector<1x32xf32>
    %228 = vector.extract_strided_slice %225 {offsets = [0, 64], sizes = [1, 32], strides = [1, 1]} : vector<1x128xf32> to vector<1x32xf32>
    %229 = vector.extract_strided_slice %225 {offsets = [0, 96], sizes = [1, 32], strides = [1, 1]} : vector<1x128xf32> to vector<1x32xf32>
    %230 = arith.mulf %226, %210 : vector<1x32xf32>
    %231 = arith.mulf %228, %229 : vector<1x32xf32>
    %232 = arith.addf %230, %231 : vector<1x32xf32>
    %233 = math.tanh %232 : vector<1x32xf32>
    %234 = arith.mulf %227, %233 : vector<1x32xf32>
    %cst_33 = arith.constant dense<0.000000e+00> : vector<1x128xf32>
    %235 = tpu.matmul %234, %3, %cst_33 {dimension_numbers = #tpu.dot_dimension_numbers<[1], [0], [0], [1], [0, 0, 1, 1], [], []>} : vector<1x32xf32>, vector<32x128xf32>, vector<1x128xf32> -> vector<1x128xf32>
    %236 = vector.extract_strided_slice %219 {offsets = [1, 0], sizes = [1, 128], strides = [1, 1]} : vector<4x128xf32> to vector<1x128xf32>
    %237 = arith.addf %235, %236 : vector<1x128xf32>
    %238 = math.tanh %237 : vector<1x128xf32>
    %239 = arith.mulf %238, %9 : vector<1x128xf32>
    %240 = arith.addf %239, %12 : vector<1x128xf32>
    %241 = vector.extract_strided_slice %240 {offsets = [0, 0], sizes = [1, 32], strides = [1, 1]} : vector<1x128xf32> to vector<1x32xf32>
    %242 = vector.extract_strided_slice %240 {offsets = [0, 32], sizes = [1, 32], strides = [1, 1]} : vector<1x128xf32> to vector<1x32xf32>
    %243 = vector.extract_strided_slice %240 {offsets = [0, 64], sizes = [1, 32], strides = [1, 1]} : vector<1x128xf32> to vector<1x32xf32>
    %244 = vector.extract_strided_slice %240 {offsets = [0, 96], sizes = [1, 32], strides = [1, 1]} : vector<1x128xf32> to vector<1x32xf32>
    %245 = arith.mulf %241, %232 : vector<1x32xf32>
    %246 = arith.mulf %243, %244 : vector<1x32xf32>
    %247 = arith.addf %245, %246 : vector<1x32xf32>
    %248 = math.tanh %247 : vector<1x32xf32>
    %249 = arith.mulf %242, %248 : vector<1x32xf32>
    %cst_34 = arith.constant dense<0.000000e+00> : vector<1x128xf32>
    %250 = tpu.matmul %249, %3, %cst_34 {dimension_numbers = #tpu.dot_dimension_numbers<[1], [0], [0], [1], [0, 0, 1, 1], [], []>} : vector<1x32xf32>, vector<32x128xf32>, vector<1x128xf32> -> vector<1x128xf32>
    %251 = vector.extract_strided_slice %219 {offsets = [2, 0], sizes = [1, 128], strides = [1, 1]} : vector<4x128xf32> to vector<1x128xf32>
    %252 = arith.addf %250, %251 : vector<1x128xf32>
    %253 = math.tanh %252 : vector<1x128xf32>
    %254 = arith.mulf %253, %9 : vector<1x128xf32>
    %255 = arith.addf %254, %12 : vector<1x128xf32>
    %256 = vector.extract_strided_slice %255 {offsets = [0, 0], sizes = [1, 32], strides = [1, 1]} : vector<1x128xf32> to vector<1x32xf32>
    %257 = vector.extract_strided_slice %255 {offsets = [0, 32], sizes = [1, 32], strides = [1, 1]} : vector<1x128xf32> to vector<1x32xf32>
    %258 = vector.extract_strided_slice %255 {offsets = [0, 64], sizes = [1, 32], strides = [1, 1]} : vector<1x128xf32> to vector<1x32xf32>
    %259 = vector.extract_strided_slice %255 {offsets = [0, 96], sizes = [1, 32], strides = [1, 1]} : vector<1x128xf32> to vector<1x32xf32>
    %260 = arith.mulf %256, %247 : vector<1x32xf32>
    %261 = arith.mulf %258, %259 : vector<1x32xf32>
    %262 = arith.addf %260, %261 : vector<1x32xf32>
    %263 = math.tanh %262 : vector<1x32xf32>
    %264 = arith.mulf %257, %263 : vector<1x32xf32>
    %cst_35 = arith.constant dense<0.000000e+00> : vector<1x128xf32>
    %265 = tpu.matmul %264, %3, %cst_35 {dimension_numbers = #tpu.dot_dimension_numbers<[1], [0], [0], [1], [0, 0, 1, 1], [], []>} : vector<1x32xf32>, vector<32x128xf32>, vector<1x128xf32> -> vector<1x128xf32>
    %266 = vector.extract_strided_slice %219 {offsets = [3, 0], sizes = [1, 128], strides = [1, 1]} : vector<4x128xf32> to vector<1x128xf32>
    %267 = arith.addf %265, %266 : vector<1x128xf32>
    %268 = math.tanh %267 : vector<1x128xf32>
    %269 = arith.mulf %268, %9 : vector<1x128xf32>
    %270 = arith.addf %269, %12 : vector<1x128xf32>
    %271 = vector.extract_strided_slice %270 {offsets = [0, 0], sizes = [1, 32], strides = [1, 1]} : vector<1x128xf32> to vector<1x32xf32>
    %272 = vector.extract_strided_slice %270 {offsets = [0, 32], sizes = [1, 32], strides = [1, 1]} : vector<1x128xf32> to vector<1x32xf32>
    %273 = vector.extract_strided_slice %270 {offsets = [0, 64], sizes = [1, 32], strides = [1, 1]} : vector<1x128xf32> to vector<1x32xf32>
    %274 = vector.extract_strided_slice %270 {offsets = [0, 96], sizes = [1, 32], strides = [1, 1]} : vector<1x128xf32> to vector<1x32xf32>
    %275 = arith.mulf %271, %262 : vector<1x32xf32>
    %276 = arith.mulf %273, %274 : vector<1x32xf32>
    %277 = arith.addf %275, %276 : vector<1x32xf32>
    %278 = math.tanh %277 : vector<1x32xf32>
    %279 = arith.mulf %272, %278 : vector<1x32xf32>
    %280 = tpu.concatenate %234, %249, %264, %279 in 1 : vector<1x32xf32>, vector<1x32xf32>, vector<1x32xf32>, vector<1x32xf32> -> vector<1x128xf32>
    %281 = arith.index_cast %c3_i32 : i32 to index
    %c0_36 = arith.constant 0 : index
    %282 = vector.load %arg5[%281, %c0_36] : memref<4x128xf32, #tpu.memory_space<vmem>>, vector<1x128xf32>
    tpu.vector_store %arg5[%281, %c0_36], %280 {strides = array<i32>} : memref<4x128xf32, #tpu.memory_space<vmem>>, vector<1x128xf32>,
    %c4_i32_37 = arith.constant 4 : i32
    %c0_38 = arith.constant 0 : index
    %c0_39 = arith.constant 0 : index
    %283 = vector.load %arg6[%c0_38, %c0_39] : memref<1x32xf32, #tpu.memory_space<vmem>>, vector<1x32xf32>
    tpu.vector_store %arg6[%c0_38, %c0_39], %279 {strides = array<i32>} : memref<1x32xf32, #tpu.memory_space<vmem>>, vector<1x32xf32>,
    %c0_40 = arith.constant 0 : index
    %c0_41 = arith.constant 0 : index
    %284 = vector.load %arg7[%c0_40, %c0_41] : memref<1x32xf32, #tpu.memory_space<vmem>>, vector<1x32xf32>
    tpu.vector_store %arg7[%c0_40, %c0_41], %277 {strides = array<i32>} : memref<1x32xf32, #tpu.memory_space<vmem>>, vector<1x32xf32>,
    return
  }
  func.func @transform_0(%arg0: i32) -> (i32, i32) {
    %c0_i32 = arith.constant 0 : i32
    %c0_i32_0 = arith.constant 0 : i32
    return %arg0, %c0_i32 : i32, i32
  }
  func.func @transform_1(%arg0: i32) -> (i32, i32) {
    %c0_i32 = arith.constant 0 : i32
    %c0_i32_0 = arith.constant 0 : i32
    %c0_i32_1 = arith.constant 0 : i32
    return %c0_i32, %c0_i32_0 : i32, i32
  }
  func.func @transform_2(%arg0: i32) -> (i32, i32) {
    %c0_i32 = arith.constant 0 : i32
    %c0_i32_0 = arith.constant 0 : i32
    %c0_i32_1 = arith.constant 0 : i32
    return %c0_i32, %c0_i32_0 : i32, i32
  }
  func.func @transform_3(%arg0: i32) -> (i32, i32) {
    %c0_i32 = arith.constant 0 : i32
    %c0_i32_0 = arith.constant 0 : i32
    %c0_i32_1 = arith.constant 0 : i32
    return %c0_i32, %c0_i32_0 : i32, i32
  }
  func.func @transform_4(%arg0: i32) -> (i32, i32) {
    %c0_i32 = arith.constant 0 : i32
    %c0_i32_0 = arith.constant 0 : i32
    return %arg0, %c0_i32 : i32, i32
  }
}

</mosaic_0001>

<llo_original>
// kernel: tpu_custom_call.1
$region0: #{tpu_custom_call.1}
  #allocation0 [shape = 'u32[]', space=smem, size = 0x4, offset = 0x4, fixed_abs, tag = 'smem constant byte address 0x4 - core index']
  #allocation1 [shape = 'u32[72,128]{1,0:T(1,128)}', space=vmem, size = 0x9000, scoped, tag = 'internal scratch']
  #allocation2 [shape = 'f32[1,32]{1,0:T(1,128)}', space=vmem, size = 0x200, scoped, tag = 'scratch operand']
  #allocation3 [shape = 'f32[1,32]{1,0:T(1,128)}', space=vmem, size = 0x200, scoped, tag = 'scratch operand']
  %s0 = inlined_call_operand.hbm [shape: f32[16,128], index: 0, kind: input, shape index: {}]
  %s1 = inlined_call_operand.hbm [shape: f32[32,128], index: 1, kind: input, shape index: {}]
  %s2 = inlined_call_operand.vmem [shape: f32[1,32], index: 2, kind: input, shape index: {}]
  %s3 = inlined_call_operand.vmem [shape: f32[1,32], index: 3, kind: input, shape index: {}]
  %s4 = inlined_call_operand.hbm [shape: f32[4,128], index: 4, kind: output, shape index: {}]
  %s5 = sld [smem:[#allocation0]]
  $region38: #{tpu_custom_call.1} parent=0
    _
  %s7 = ssub.s32 1, %s5
  %s8 = scalar_select 0, %s7, %s5
  $region1: #{tpu_custom_call.1} parent=0
    #allocation4 [shape = 'u8[8192]{0}', space=vmem, size = 0x2000, scoped, tag = 'input window, operand 0, single buffered']
    #allocation5 [shape = 's32[1]{0}', space=sflag, size = 0x4, scoped, tag = 'scoped memory for tpu_custom_call.1']
    #allocation6 [shape = 's32[1]{0}', space=sflag, size = 0x4, scoped, tag = 'scoped memory for tpu_custom_call.1']
    #allocation7 [shape = 'u8[16384]{0}', space=vmem, size = 0x4000, scoped, tag = 'input window, operand 1, single buffered']
    #allocation8 [shape = 's32[1]{0}', space=sflag, size = 0x4, scoped, tag = 'scoped memory for tpu_custom_call.1']
    #allocation9 [shape = 'u8[2048]{0}', space=vmem, size = 0x800, scoped, tag = 'output window, operand 0, single buffered']
    %9 = vsyncpa [#allocation5], 0
    %10 = vsyncpa [#allocation8], 0
    %11 = vsyncpa [#allocation6], 0
    // Predicated region
    $region2: #{tpu_custom_call.1} parent=1 // pred_check
      _
    $region3: #{tpu_custom_call.1} parent=1 // pred_check_branch
      %13 = sbr.rel (0) target = $region5
    $region4: #{tpu_custom_call.1} parent=1 // pred_region
      %15 = vsyncadd [#allocation5], 0
      %s16 = sshll.u32 %s0, 4
      %s17 = int_to_ptr.hbm [resolvable:$true] %s16
      %s18 = sshll.u32 [#allocation4], 4
      %s19 = int_to_ptr.vmem [resolvable:$true] %s18
      %24 = dma.hbm_to_vmem [thread:$0]  %s17, 256, %s19, [#allocation5], 128, 128, 8
    $region5: #{tpu_custom_call.1} parent=1 // pred_fallthru
      _
    // Predicated region
    $region6: #{tpu_custom_call.1} parent=1 // pred_check
      _
    $region7: #{tpu_custom_call.1} parent=1 // pred_check_branch
      %26 = sbr.rel (0) target = $region9
    $region8: #{tpu_custom_call.1} parent=1 // pred_region
      %28 = vsyncadd [#allocation8], 0
      %s29 = sshll.u32 %s1, 4
      %s30 = int_to_ptr.hbm [resolvable:$true] %s29
      %s31 = sshll.u32 [#allocation7], 4
      %s32 = int_to_ptr.vmem [resolvable:$true] %s31
      %37 = dma.hbm_to_vmem [thread:$0]  %s30, 512, %s32, [#allocation8], 128, 128, 8
    $region9: #{tpu_custom_call.1} parent=1 // pred_fallthru
      _
    // Predicated region
    $region10: #{tpu_custom_call.1} parent=1 // pred_check
      _
    $region11: #{tpu_custom_call.1} parent=1 // pred_check_branch
      %39 = sbr.rel (0) target = $region13
    $region12: #{tpu_custom_call.1} parent=1 // pred_region
      _
    $region13: #{tpu_custom_call.1} parent=1 // pred_fallthru
      _
    // Predicated region
    $region14: #{tpu_custom_call.1} parent=1 // pred_check
      _
    $region15: #{tpu_custom_call.1} parent=1 // pred_check_branch
      %41 = sbr.rel (0) target = $region17
    $region16: #{tpu_custom_call.1} parent=1 // pred_region
      _
    $region17: #{tpu_custom_call.1} parent=1 // pred_fallthru
      _
    // Predicated region
    $region18: #{tpu_custom_call.1} parent=1 // pred_check
      _
    $region19: #{tpu_custom_call.1} parent=1 // pred_check_branch
      %43 = sbr.rel (0) target = $region21
    $region20: #{tpu_custom_call.1} parent=1 // pred_region
      %45 = dma.done [#allocation5], 256
    $region21: #{tpu_custom_call.1} parent=1 // pred_fallthru
      _
    // Predicated region
    $region22: #{tpu_custom_call.1} parent=1 // pred_check
      _
    $region23: #{tpu_custom_call.1} parent=1 // pred_check_branch
      %47 = sbr.rel (0) target = $region25
    $region24: #{tpu_custom_call.1} parent=1 // pred_region
      %49 = dma.done [#allocation8], 512
    $region25: #{tpu_custom_call.1} parent=1 // pred_fallthru
      _
    %p50 = scmp.eq.s32.totalorder 0, 0
    // Predicated region
    $region26: #{tpu_custom_call.1} parent=1 // pred_check
      %p51 = pneg %p50
    $region27: #{tpu_custom_call.1} parent=1 // pred_check_branch
      %53 = sbr.rel (%p51) target = $region29
    $region28: #{tpu_custom_call.1} parent=1 // pred_region
      %v54 = vld [vmem:[%s2] sm:$0x1]
      %vm55 = vcmask 253952
      %56 = vst.msk [vmem:[#allocation2] sm:$0x1] %vm55, %v54
      %v57 = vld [vmem:[%s3] sm:$0x1]
      %58 = vst.msk [vmem:[#allocation3] sm:$0x1] %vm55, %v57
    $region29: #{tpu_custom_call.1} parent=1 // pred_fallthru
      _
    %v59 = vld [vmem:[#allocation7] sm:$0xff]
    %v60 = vld [vmem:[#allocation7 + $0x8] sm:$0xff]
    %v61 = vld [vmem:[#allocation7 + $0x10] sm:$0xff]
    %v62 = vld [vmem:[#allocation7 + $0x18] sm:$0xff]
    %v63 = vlaneseq
    %v64 = vand.u32 %v63, 127
    %vm65 = vcmp.lt.s32.totalorder %v64, 96
    %v66 = vsel %vm65, 0.5, 1.0
    %v67 = vsel %vm65, 0.5, 0.0
    %v68 = vld [vmem:[#allocation2] sm:$0x1]
    %v69 = vld [vmem:[#allocation3] sm:$0x1]
    %v70 = vld [vmem:[#allocation4] sm:$0xf]
    %vm71 = vcmask 261120
    %v73 = vsel %vm71, %v68, 0
    %75 = vmatpush.msra.mxu0 0.0
    %76 = vmatpush.msra.mxu0 0.0
    %77 = vmatpush.msra.mxu0 0.0
    %78 = vmatpush.msra.mxu0 0.0
    %79 = vmatpush.msra.mxu0 0.0
    %80 = vmatpush.msra.mxu0 0.0
    %81 = vmatpush.msra.mxu0 0.0
    %82 = vmatpush.msra.mxu0 0.0
    %83 = vmatpush.msra.mxu0 0.0
    %84 = vmatpush.msra.mxu0 0.0
    %85 = vmatpush.msra.mxu0 0.0
    %86 = vmatpush.msra.mxu0 0.0
    %87 = vmatpush.msra.mxu0 %v62
    %88 = vmatpush.msra.mxu0 %v61
    %89 = vmatpush.msra.mxu0 %v60
    %90 = vmatpush.msra.mxu0 %v59
    %91 = vmatmul.f32.gmra.mxu0 %v73
    %v92 = vpop.f32.mrf.mxu0
    %v93 = vadd.f32 %v70, %v92
    %94 = vdwg.mxu0
    %v95 = vtanh.pop %v93
    %v96 = vmul.f32 %v95, %v66
    %v97 = vadd.f32 %v96, %v67
    %v98 = vmul.f32 %v97, %v69
    %100 = vrot.lane.b32.xlu0 %v97, 96
    %v101 = vpop.permute.xlu0 %100
    %v103 = vmul.f32 %v97, %v101
    %105 = vrot.lane.b32.xlu0 %v103, 64
    %v106 = vpop.permute.xlu0 %105
    %v108 = vadd.f32 %v98, %v106
    %v109 = vtanh.pop %v108
    %111 = vrot.lane.b32.xlu0 %v109, 32
    %v112 = vpop.permute.xlu0 %111
    %v114 = vmul.f32 %v97, %v112
    %116 = vrot.lane.b32.xlu0 %v114, 96
    %v117 = vpop.permute.xlu0 %116
    %v119 = vrot.slane %v70, 1
    %v121 = vsel %vm71, %v117, 0
    %123 = vmatpush.msra.mxu0 0.0
    %124 = vmatpush.msra.mxu0 0.0
    %125 = vmatpush.msra.mxu0 0.0
    %126 = vmatpush.msra.mxu0 0.0
    %127 = vmatpush.msra.mxu0 0.0
    %128 = vmatpush.msra.mxu0 0.0
    %129 = vmatpush.msra.mxu0 0.0
    %130 = vmatpush.msra.mxu0 0.0
    %131 = vmatpush.msra.mxu0 0.0
    %132 = vmatpush.msra.mxu0 0.0
    %133 = vmatpush.msra.mxu0 0.0
    %134 = vmatpush.msra.mxu0 0.0
    %135 = vmatpush.msra.mxu0 %v62
    %136 = vmatpush.msra.mxu0 %v61
    %137 = vmatpush.msra.mxu0 %v60
    %138 = vmatpush.msra.mxu0 %v59
    %139 = vmatmul.f32.gmra.mxu0 %v121
    %v140 = vpop.f32.mrf.mxu0
    %v141 = vadd.f32 %v119, %v140
    %142 = vdwg.mxu0
    %v143 = vtanh.pop %v141
    %v144 = vmul.f32 %v143, %v66
    %v145 = vadd.f32 %v144, %v67
    %v146 = vmul.f32 %v145, %v108
    %148 = vrot.lane.b32.xlu0 %v145, 96
    %v149 = vpop.permute.xlu0 %148
    %v151 = vmul.f32 %v145, %v149
    %153 = vrot.lane.b32.xlu0 %v151, 64
    %v154 = vpop.permute.xlu0 %153
    %v156 = vadd.f32 %v146, %v154
    %v157 = vtanh.pop %v156
    %159 = vrot.lane.b32.xlu0 %v157, 32
    %v160 = vpop.permute.xlu0 %159
    %v162 = vmul.f32 %v145, %v160
    %164 = vrot.lane.b32.xlu0 %v162, 96
    %v165 = vpop.permute.xlu0 %164
    %v166 = vrot.slane %v70, 2
    %v168 = vsel %vm71, %v165, 0
    %170 = vmatpush.msra.mxu0 0.0
    %171 = vmatpush.msra.mxu0 0.0
    %172 = vmatpush.msra.mxu0 0.0
    %173 = vmatpush.msra.mxu0 0.0
    %174 = vmatpush.msra.mxu0 0.0
    %175 = vmatpush.msra.mxu0 0.0
    %176 = vmatpush.msra.mxu0 0.0
    %177 = vmatpush.msra.mxu0 0.0
    %178 = vmatpush.msra.mxu0 0.0
    %179 = vmatpush.msra.mxu0 0.0
    %180 = vmatpush.msra.mxu0 0.0
    %181 = vmatpush.msra.mxu0 0.0
    %182 = vmatpush.msra.mxu0 %v62
    %183 = vmatpush.msra.mxu0 %v61
    %184 = vmatpush.msra.mxu0 %v60
    %185 = vmatpush.msra.mxu0 %v59
    %186 = vmatmul.f32.gmra.mxu0 %v168
    %v187 = vpop.f32.mrf.mxu0
    %v188 = vadd.f32 %v166, %v187
    %189 = vdwg.mxu0
    %v190 = vtanh.pop %v188
    %v191 = vmul.f32 %v190, %v66
    %v192 = vadd.f32 %v191, %v67
    %v193 = vmul.f32 %v192, %v156
    %195 = vrot.lane.b32.xlu0 %v192, 96
    %v196 = vpop.permute.xlu0 %195
    %v198 = vmul.f32 %v192, %v196
    %200 = vrot.lane.b32.xlu0 %v198, 64
    %v201 = vpop.permute.xlu0 %200
    %v203 = vadd.f32 %v193, %v201
    %v204 = vtanh.pop %v203
    %206 = vrot.lane.b32.xlu0 %v204, 32
    %v207 = vpop.permute.xlu0 %206
    %v209 = vmul.f32 %v192, %v207
    %211 = vrot.lane.b32.xlu0 %v209, 96
    %v212 = vpop.permute.xlu0 %211
    %v213 = vrot.slane %v70, 3
    %v215 = vsel %vm71, %v212, 0
    %217 = vmatpush.msra.mxu0 0.0
    %218 = vmatpush.msra.mxu0 0.0
    %219 = vmatpush.msra.mxu0 0.0
    %220 = vmatpush.msra.mxu0 0.0
    %221 = vmatpush.msra.mxu0 0.0
    %222 = vmatpush.msra.mxu0 0.0
    %223 = vmatpush.msra.mxu0 0.0
    %224 = vmatpush.msra.mxu0 0.0
    %225 = vmatpush.msra.mxu0 0.0
    %226 = vmatpush.msra.mxu0 0.0
    %227 = vmatpush.msra.mxu0 0.0
    %228 = vmatpush.msra.mxu0 0.0
    %229 = vmatpush.msra.mxu0 %v62
    %230 = vmatpush.msra.mxu0 %v61
    %231 = vmatpush.msra.mxu0 %v60
    %232 = vmatpush.msra.mxu0 %v59
    %233 = vmatmul.f32.gmra.mxu0 %v215
    %v234 = vpop.f32.mrf.mxu0
    %v235 = vadd.f32 %v213, %v234
    %236 = vdwg.mxu0
    %v237 = vtanh.pop %v235
    %v238 = vmul.f32 %v237, %v66
    %v239 = vadd.f32 %v238, %v67
    %v240 = vmul.f32 %v239, %v203
    %242 = vrot.lane.b32.xlu0 %v239, 96
    %v243 = vpop.permute.xlu0 %242
    %v245 = vmul.f32 %v239, %v243
    %247 = vrot.lane.b32.xlu0 %v245, 64
    %v248 = vpop.permute.xlu0 %247
    %v250 = vadd.f32 %v240, %v248
    %v251 = vtanh.pop %v250
    %253 = vrot.lane.b32.xlu0 %v251, 32
    %v254 = vpop.permute.xlu0 %253
    %v256 = vmul.f32 %v239, %v254
    %258 = vrot.lane.b32.xlu0 %v209, 32
    %v259 = vpop.permute.xlu0 %258
    %262 = vrot.lane.b32.xlu0 %v256, 64
    %v263 = vpop.permute.xlu0 %262
    %v265 = vsel %vm71, %v117, %v162
    %vm266 = vcmask 523264
    %v267 = vsel %vm266, %v265, %v259
    %vm268 = vcmask 785408
    %v269 = vsel %vm268, %v267, %v263
    %270 = vst [vmem:[#allocation9] sm:$0x1] %v269
    %s271 = scalar_lea.vmem [#allocation4], 4
    %v272 = vld [vmem:[%s271] sm:$0xf]
    %273 = vrot.lane.b32.xlu0 %v256, 96
    %v274 = vpop.permute.xlu0 %273
    %v275 = vsel %vm71, %v274, 0
    %277 = vmatpush.msra.mxu0 0.0
    %278 = vmatpush.msra.mxu0 0.0
    %279 = vmatpush.msra.mxu0 0.0
    %280 = vmatpush.msra.mxu0 0.0
    %281 = vmatpush.msra.mxu0 0.0
    %282 = vmatpush.msra.mxu0 0.0
    %283 = vmatpush.msra.mxu0 0.0
    %284 = vmatpush.msra.mxu0 0.0
    %285 = vmatpush.msra.mxu0 0.0
    %286 = vmatpush.msra.mxu0 0.0
    %287 = vmatpush.msra.mxu0 0.0
    %288 = vmatpush.msra.mxu0 0.0
    %289 = vmatpush.msra.mxu0 %v62
    %290 = vmatpush.msra.mxu0 %v61
    %291 = vmatpush.msra.mxu0 %v60
    %292 = vmatpush.msra.mxu0 %v59
    %293 = vmatmul.f32.gmra.mxu0 %v275
    %v294 = vpop.f32.mrf.mxu0
    %v295 = vadd.f32 %v272, %v294
    %296 = vdwg.mxu0
    %v297 = vtanh.pop %v295
    %v298 = vmul.f32 %v297, %v66
    %v299 = vadd.f32 %v298, %v67
    %v300 = vmul.f32 %v299, %v250
    %302 = vrot.lane.b32.xlu0 %v299, 96
    %v303 = vpop.permute.xlu0 %302
    %v305 = vmul.f32 %v299, %v303
    %307 = vrot.lane.b32.xlu0 %v305, 64
    %v308 = vpop.permute.xlu0 %307
    %v310 = vadd.f32 %v300, %v308
    %v311 = vtanh.pop %v310
    %313 = vrot.lane.b32.xlu0 %v311, 32
    %v314 = vpop.permute.xlu0 %313
    %v316 = vmul.f32 %v299, %v314
    %318 = vrot.lane.b32.xlu0 %v316, 96
    %v319 = vpop.permute.xlu0 %318
    %v321 = vrot.slane %v272, 1
    %v323 = vsel %vm71, %v319, 0
    %325 = vmatpush.msra.mxu0 0.0
    %326 = vmatpush.msra.mxu0 0.0
    %327 = vmatpush.msra.mxu0 0.0
    %328 = vmatpush.msra.mxu0 0.0
    %329 = vmatpush.msra.mxu0 0.0
    %330 = vmatpush.msra.mxu0 0.0
    %331 = vmatpush.msra.mxu0 0.0
    %332 = vmatpush.msra.mxu0 0.0
    %333 = vmatpush.msra.mxu0 0.0
    %334 = vmatpush.msra.mxu0 0.0
    %335 = vmatpush.msra.mxu0 0.0
    %336 = vmatpush.msra.mxu0 0.0
    %337 = vmatpush.msra.mxu0 %v62
    %338 = vmatpush.msra.mxu0 %v61
    %339 = vmatpush.msra.mxu0 %v60
    %340 = vmatpush.msra.mxu0 %v59
    %341 = vmatmul.f32.gmra.mxu0 %v323
    %v342 = vpop.f32.mrf.mxu0
    %v343 = vadd.f32 %v321, %v342
    %344 = vdwg.mxu0
    %v345 = vtanh.pop %v343
    %v346 = vmul.f32 %v345, %v66
    %v347 = vadd.f32 %v346, %v67
    %v348 = vmul.f32 %v347, %v310
    %350 = vrot.lane.b32.xlu0 %v347, 96
    %v351 = vpop.permute.xlu0 %350
    %v353 = vmul.f32 %v347, %v351
    %355 = vrot.lane.b32.xlu0 %v353, 64
    %v356 = vpop.permute.xlu0 %355
    %v358 = vadd.f32 %v348, %v356
    %v359 = vtanh.pop %v358
    %361 = vrot.lane.b32.xlu0 %v359, 32
    %v362 = vpop.permute.xlu0 %361
    %v364 = vmul.f32 %v347, %v362
    %366 = vrot.lane.b32.xlu0 %v364, 96
    %v367 = vpop.permute.xlu0 %366
    %v368 = vrot.slane %v272, 2
    %v370 = vsel %vm71, %v367, 0
    %372 = vmatpush.msra.mxu0 0.0
    %373 = vmatpush.msra.mxu0 0.0
    %374 = vmatpush.msra.mxu0 0.0
    %375 = vmatpush.msra.mxu0 0.0
    %376 = vmatpush.msra.mxu0 0.0
    %377 = vmatpush.msra.mxu0 0.0
    %378 = vmatpush.msra.mxu0 0.0
    %379 = vmatpush.msra.mxu0 0.0
    %380 = vmatpush.msra.mxu0 0.0
    %381 = vmatpush.msra.mxu0 0.0
    %382 = vmatpush.msra.mxu0 0.0
    %383 = vmatpush.msra.mxu0 0.0
    %384 = vmatpush.msra.mxu0 %v62
    %385 = vmatpush.msra.mxu0 %v61
    %386 = vmatpush.msra.mxu0 %v60
    %387 = vmatpush.msra.mxu0 %v59
    %388 = vmatmul.f32.gmra.mxu0 %v370
    %v389 = vpop.f32.mrf.mxu0
    %v390 = vadd.f32 %v368, %v389
    %391 = vdwg.mxu0
    %v392 = vtanh.pop %v390
    %v393 = vmul.f32 %v392, %v66
    %v394 = vadd.f32 %v393, %v67
    %v395 = vmul.f32 %v394, %v358
    %397 = vrot.lane.b32.xlu0 %v394, 96
    %v398 = vpop.permute.xlu0 %397
    %v400 = vmul.f32 %v394, %v398
    %402 = vrot.lane.b32.xlu0 %v400, 64
    %v403 = vpop.permute.xlu0 %402
    %v405 = vadd.f32 %v395, %v403
    %v406 = vtanh.pop %v405
    %408 = vrot.lane.b32.xlu0 %v406, 32
    %v409 = vpop.permute.xlu0 %408
    %v411 = vmul.f32 %v394, %v409
    %413 = vrot.lane.b32.xlu0 %v411, 96
    %v414 = vpop.permute.xlu0 %413
    %v415 = vrot.slane %v272, 3
    %v417 = vsel %vm71, %v414, 0
    %419 = vmatpush.msra.mxu0 0.0
    %420 = vmatpush.msra.mxu0 0.0
    %421 = vmatpush.msra.mxu0 0.0
    %422 = vmatpush.msra.mxu0 0.0
    %423 = vmatpush.msra.mxu0 0.0
    %424 = vmatpush.msra.mxu0 0.0
    %425 = vmatpush.msra.mxu0 0.0
    %426 = vmatpush.msra.mxu0 0.0
    %427 = vmatpush.msra.mxu0 0.0
    %428 = vmatpush.msra.mxu0 0.0
    %429 = vmatpush.msra.mxu0 0.0
    %430 = vmatpush.msra.mxu0 0.0
    %431 = vmatpush.msra.mxu0 %v62
    %432 = vmatpush.msra.mxu0 %v61
    %433 = vmatpush.msra.mxu0 %v60
    %434 = vmatpush.msra.mxu0 %v59
    %435 = vmatmul.f32.gmra.mxu0 %v417
    %v436 = vpop.f32.mrf.mxu0
    %v437 = vadd.f32 %v415, %v436
    %438 = vdwg.mxu0
    %v439 = vtanh.pop %v437
    %v440 = vmul.f32 %v439, %v66
    %v441 = vadd.f32 %v440, %v67
    %v442 = vmul.f32 %v441, %v405
    %444 = vrot.lane.b32.xlu0 %v441, 96
    %v445 = vpop.permute.xlu0 %444
    %v447 = vmul.f32 %v441, %v445
    %449 = vrot.lane.b32.xlu0 %v447, 64
    %v450 = vpop.permute.xlu0 %449
    %v452 = vadd.f32 %v442, %v450
    %v453 = vtanh.pop %v452
    %455 = vrot.lane.b32.xlu0 %v453, 32
    %v456 = vpop.permute.xlu0 %455
    %v458 = vmul.f32 %v441, %v456
    %460 = vrot.lane.b32.xlu0 %v411, 32
    %v461 = vpop.permute.xlu0 %460
    %464 = vrot.lane.b32.xlu0 %v458, 64
    %v465 = vpop.permute.xlu0 %464
    %v467 = vsel %vm71, %v319, %v364
    %v468 = vsel %vm266, %v467, %v461
    %v469 = vsel %vm268, %v468, %v465
    %470 = vst [vmem:[#allocation9 + $0x1] sm:$0x1] %v469
    %s471 = scalar_lea.vmem [#allocation4], 8
    %v472 = vld [vmem:[%s471] sm:$0xf]
    %473 = vrot.lane.b32.xlu0 %v458, 96
    %v474 = vpop.permute.xlu0 %473
    %v475 = vsel %vm71, %v474, 0
    %477 = vmatpush.msra.mxu0 0.0
    %478 = vmatpush.msra.mxu0 0.0
    %479 = vmatpush.msra.mxu0 0.0
    %480 = vmatpush.msra.mxu0 0.0
    %481 = vmatpush.msra.mxu0 0.0
    %482 = vmatpush.msra.mxu0 0.0
    %483 = vmatpush.msra.mxu0 0.0
    %484 = vmatpush.msra.mxu0 0.0
    %485 = vmatpush.msra.mxu0 0.0
    %486 = vmatpush.msra.mxu0 0.0
    %487 = vmatpush.msra.mxu0 0.0
    %488 = vmatpush.msra.mxu0 0.0
    %489 = vmatpush.msra.mxu0 %v62
    %490 = vmatpush.msra.mxu0 %v61
    %491 = vmatpush.msra.mxu0 %v60
    %492 = vmatpush.msra.mxu0 %v59
    %493 = vmatmul.f32.gmra.mxu0 %v475
    %v494 = vpop.f32.mrf.mxu0
    %v495 = vadd.f32 %v472, %v494
    %496 = vdwg.mxu0
    %v497 = vtanh.pop %v495
    %v498 = vmul.f32 %v497, %v66
    %v499 = vadd.f32 %v498, %v67
    %v500 = vmul.f32 %v499, %v452
    %502 = vrot.lane.b32.xlu0 %v499, 96
    %v503 = vpop.permute.xlu0 %502
    %v505 = vmul.f32 %v499, %v503
    %507 = vrot.lane.b32.xlu0 %v505, 64
    %v508 = vpop.permute.xlu0 %507
    %v510 = vadd.f32 %v500, %v508
    %v511 = vtanh.pop %v510
    %513 = vrot.lane.b32.xlu0 %v511, 32
    %v514 = vpop.permute.xlu0 %513
    %v516 = vmul.f32 %v499, %v514
    %518 = vrot.lane.b32.xlu0 %v516, 96
    %v519 = vpop.permute.xlu0 %518
    %v521 = vrot.slane %v472, 1
    %v523 = vsel %vm71, %v519, 0
    %525 = vmatpush.msra.mxu0 0.0
    %526 = vmatpush.msra.mxu0 0.0
    %527 = vmatpush.msra.mxu0 0.0
    %528 = vmatpush.msra.mxu0 0.0
    %529 = vmatpush.msra.mxu0 0.0
    %530 = vmatpush.msra.mxu0 0.0
    %531 = vmatpush.msra.mxu0 0.0
    %532 = vmatpush.msra.mxu0 0.0
    %533 = vmatpush.msra.mxu0 0.0
    %534 = vmatpush.msra.mxu0 0.0
    %535 = vmatpush.msra.mxu0 0.0
    %536 = vmatpush.msra.mxu0 0.0
    %537 = vmatpush.msra.mxu0 %v62
    %538 = vmatpush.msra.mxu0 %v61
    %539 = vmatpush.msra.mxu0 %v60
    %540 = vmatpush.msra.mxu0 %v59
    %541 = vmatmul.f32.gmra.mxu0 %v523
    %v542 = vpop.f32.mrf.mxu0
    %v543 = vadd.f32 %v521, %v542
    %544 = vdwg.mxu0
    %v545 = vtanh.pop %v543
    %v546 = vmul.f32 %v545, %v66
    %v547 = vadd.f32 %v546, %v67
    %v548 = vmul.f32 %v547, %v510
    %550 = vrot.lane.b32.xlu0 %v547, 96
    %v551 = vpop.permute.xlu0 %550
    %v553 = vmul.f32 %v547, %v551
    %555 = vrot.lane.b32.xlu0 %v553, 64
    %v556 = vpop.permute.xlu0 %555
    %v558 = vadd.f32 %v548, %v556
    %v559 = vtanh.pop %v558
    %561 = vrot.lane.b32.xlu0 %v559, 32
    %v562 = vpop.permute.xlu0 %561
    %v564 = vmul.f32 %v547, %v562
    %566 = vrot.lane.b32.xlu0 %v564, 96
    %v567 = vpop.permute.xlu0 %566
    %v568 = vrot.slane %v472, 2
    %v570 = vsel %vm71, %v567, 0
    %572 = vmatpush.msra.mxu0 0.0
    %573 = vmatpush.msra.mxu0 0.0
    %574 = vmatpush.msra.mxu0 0.0
    %575 = vmatpush.msra.mxu0 0.0
    %576 = vmatpush.msra.mxu0 0.0
    %577 = vmatpush.msra.mxu0 0.0
    %578 = vmatpush.msra.mxu0 0.0
    %579 = vmatpush.msra.mxu0 0.0
    %580 = vmatpush.msra.mxu0 0.0
    %581 = vmatpush.msra.mxu0 0.0
    %582 = vmatpush.msra.mxu0 0.0
    %583 = vmatpush.msra.mxu0 0.0
    %584 = vmatpush.msra.mxu0 %v62
    %585 = vmatpush.msra.mxu0 %v61
    %586 = vmatpush.msra.mxu0 %v60
    %587 = vmatpush.msra.mxu0 %v59
    %588 = vmatmul.f32.gmra.mxu0 %v570
    %v589 = vpop.f32.mrf.mxu0
    %v590 = vadd.f32 %v568, %v589
    %591 = vdwg.mxu0
    %v592 = vtanh.pop %v590
    %v593 = vmul.f32 %v592, %v66
    %v594 = vadd.f32 %v593, %v67
    %v595 = vmul.f32 %v594, %v558
    %597 = vrot.lane.b32.xlu0 %v594, 96
    %v598 = vpop.permute.xlu0 %597
    %v600 = vmul.f32 %v594, %v598
    %602 = vrot.lane.b32.xlu0 %v600, 64
    %v603 = vpop.permute.xlu0 %602
    %v605 = vadd.f32 %v595, %v603
    %v606 = vtanh.pop %v605
    %608 = vrot.lane.b32.xlu0 %v606, 32
    %v609 = vpop.permute.xlu0 %608
    %v611 = vmul.f32 %v594, %v609
    %613 = vrot.lane.b32.xlu0 %v611, 96
    %v614 = vpop.permute.xlu0 %613
    %v615 = vrot.slane %v472, 3
    %v617 = vsel %vm71, %v614, 0
    %619 = vmatpush.msra.mxu0 0.0
    %620 = vmatpush.msra.mxu0 0.0
    %621 = vmatpush.msra.mxu0 0.0
    %622 = vmatpush.msra.mxu0 0.0
    %623 = vmatpush.msra.mxu0 0.0
    %624 = vmatpush.msra.mxu0 0.0
    %625 = vmatpush.msra.mxu0 0.0
    %626 = vmatpush.msra.mxu0 0.0
    %627 = vmatpush.msra.mxu0 0.0
    %628 = vmatpush.msra.mxu0 0.0
    %629 = vmatpush.msra.mxu0 0.0
    %630 = vmatpush.msra.mxu0 0.0
    %631 = vmatpush.msra.mxu0 %v62
    %632 = vmatpush.msra.mxu0 %v61
    %633 = vmatpush.msra.mxu0 %v60
    %634 = vmatpush.msra.mxu0 %v59
    %635 = vmatmul.f32.gmra.mxu0 %v617
    %v636 = vpop.f32.mrf.mxu0
    %v637 = vadd.f32 %v615, %v636
    %638 = vdwg.mxu0
    %v639 = vtanh.pop %v637
    %v640 = vmul.f32 %v639, %v66
    %v641 = vadd.f32 %v640, %v67
    %v642 = vmul.f32 %v641, %v605
    %644 = vrot.lane.b32.xlu0 %v641, 96
    %v645 = vpop.permute.xlu0 %644
    %v647 = vmul.f32 %v641, %v645
    %649 = vrot.lane.b32.xlu0 %v647, 64
    %v650 = vpop.permute.xlu0 %649
    %v652 = vadd.f32 %v642, %v650
    %v653 = vtanh.pop %v652
    %655 = vrot.lane.b32.xlu0 %v653, 32
    %v656 = vpop.permute.xlu0 %655
    %v658 = vmul.f32 %v641, %v656
    %660 = vrot.lane.b32.xlu0 %v611, 32
    %v661 = vpop.permute.xlu0 %660
    %664 = vrot.lane.b32.xlu0 %v658, 64
    %v665 = vpop.permute.xlu0 %664
    %v667 = vsel %vm71, %v519, %v564
    %v668 = vsel %vm266, %v667, %v661
    %v669 = vsel %vm268, %v668, %v665
    %670 = vst [vmem:[#allocation9 + $0x2] sm:$0x1] %v669
    %s671 = scalar_lea.vmem [#allocation4], 12
    %v672 = vld [vmem:[%s671] sm:$0xf]
    %673 = vrot.lane.b32.xlu0 %v658, 96
    %v674 = vpop.permute.xlu0 %673
    %v675 = vsel %vm71, %v674, 0
    %677 = vmatpush.msra.mxu0 0.0
    %678 = vmatpush.msra.mxu0 0.0
    %679 = vmatpush.msra.mxu0 0.0
    %680 = vmatpush.msra.mxu0 0.0
    %681 = vmatpush.msra.mxu0 0.0
    %682 = vmatpush.msra.mxu0 0.0
    %683 = vmatpush.msra.mxu0 0.0
    %684 = vmatpush.msra.mxu0 0.0
    %685 = vmatpush.msra.mxu0 0.0
    %686 = vmatpush.msra.mxu0 0.0
    %687 = vmatpush.msra.mxu0 0.0
    %688 = vmatpush.msra.mxu0 0.0
    %689 = vmatpush.msra.mxu0 %v62
    %690 = vmatpush.msra.mxu0 %v61
    %691 = vmatpush.msra.mxu0 %v60
    %692 = vmatpush.msra.mxu0 %v59
    %693 = vmatmul.f32.gmra.mxu0 %v675
    %v694 = vpop.f32.mrf.mxu0
    %v695 = vadd.f32 %v672, %v694
    %696 = vdwg.mxu0
    %v697 = vtanh.pop %v695
    %v698 = vmul.f32 %v697, %v66
    %v699 = vadd.f32 %v698, %v67
    %v700 = vmul.f32 %v699, %v652
    %702 = vrot.lane.b32.xlu0 %v699, 96
    %v703 = vpop.permute.xlu0 %702
    %v705 = vmul.f32 %v699, %v703
    %707 = vrot.lane.b32.xlu0 %v705, 64
    %v708 = vpop.permute.xlu0 %707
    %v710 = vadd.f32 %v700, %v708
    %v711 = vtanh.pop %v710
    %713 = vrot.lane.b32.xlu0 %v711, 32
    %v714 = vpop.permute.xlu0 %713
    %v716 = vmul.f32 %v699, %v714
    %718 = vrot.lane.b32.xlu0 %v716, 96
    %v719 = vpop.permute.xlu0 %718
    %v721 = vrot.slane %v672, 1
    %v723 = vsel %vm71, %v719, 0
    %725 = vmatpush.msra.mxu0 0.0
    %726 = vmatpush.msra.mxu0 0.0
    %727 = vmatpush.msra.mxu0 0.0
    %728 = vmatpush.msra.mxu0 0.0
    %729 = vmatpush.msra.mxu0 0.0
    %730 = vmatpush.msra.mxu0 0.0
    %731 = vmatpush.msra.mxu0 0.0
    %732 = vmatpush.msra.mxu0 0.0
    %733 = vmatpush.msra.mxu0 0.0
    %734 = vmatpush.msra.mxu0 0.0
    %735 = vmatpush.msra.mxu0 0.0
    %736 = vmatpush.msra.mxu0 0.0
    %737 = vmatpush.msra.mxu0 %v62
    %738 = vmatpush.msra.mxu0 %v61
    %739 = vmatpush.msra.mxu0 %v60
    %740 = vmatpush.msra.mxu0 %v59
    %741 = vmatmul.f32.gmra.mxu0 %v723
    %v742 = vpop.f32.mrf.mxu0
    %v743 = vadd.f32 %v721, %v742
    %744 = vdwg.mxu0
    %v745 = vtanh.pop %v743
    %v746 = vmul.f32 %v745, %v66
    %v747 = vadd.f32 %v746, %v67
    %v748 = vmul.f32 %v747, %v710
    %750 = vrot.lane.b32.xlu0 %v747, 96
    %v751 = vpop.permute.xlu0 %750
    %v753 = vmul.f32 %v747, %v751
    %755 = vrot.lane.b32.xlu0 %v753, 64
    %v756 = vpop.permute.xlu0 %755
    %v758 = vadd.f32 %v748, %v756
    %v759 = vtanh.pop %v758
    %761 = vrot.lane.b32.xlu0 %v759, 32
    %v762 = vpop.permute.xlu0 %761
    %v764 = vmul.f32 %v747, %v762
    %766 = vrot.lane.b32.xlu0 %v764, 96
    %v767 = vpop.permute.xlu0 %766
    %v768 = vrot.slane %v672, 2
    %v770 = vsel %vm71, %v767, 0
    %772 = vmatpush.msra.mxu0 0.0
    %773 = vmatpush.msra.mxu0 0.0
    %774 = vmatpush.msra.mxu0 0.0
    %775 = vmatpush.msra.mxu0 0.0
    %776 = vmatpush.msra.mxu0 0.0
    %777 = vmatpush.msra.mxu0 0.0
    %778 = vmatpush.msra.mxu0 0.0
    %779 = vmatpush.msra.mxu0 0.0
    %780 = vmatpush.msra.mxu0 0.0
    %781 = vmatpush.msra.mxu0 0.0
    %782 = vmatpush.msra.mxu0 0.0
    %783 = vmatpush.msra.mxu0 0.0
    %784 = vmatpush.msra.mxu0 %v62
    %785 = vmatpush.msra.mxu0 %v61
    %786 = vmatpush.msra.mxu0 %v60
    %787 = vmatpush.msra.mxu0 %v59
    %788 = vmatmul.f32.gmra.mxu0 %v770
    %v789 = vpop.f32.mrf.mxu0
    %v790 = vadd.f32 %v768, %v789
    %791 = vdwg.mxu0
    %v792 = vtanh.pop %v790
    %v793 = vmul.f32 %v792, %v66
    %v794 = vadd.f32 %v793, %v67
    %v795 = vmul.f32 %v794, %v758
    %797 = vrot.lane.b32.xlu0 %v794, 96
    %v798 = vpop.permute.xlu0 %797
    %v800 = vmul.f32 %v794, %v798
    %802 = vrot.lane.b32.xlu0 %v800, 64
    %v803 = vpop.permute.xlu0 %802
    %v805 = vadd.f32 %v795, %v803
    %v806 = vtanh.pop %v805
    %808 = vrot.lane.b32.xlu0 %v806, 32
    %v809 = vpop.permute.xlu0 %808
    %v811 = vmul.f32 %v794, %v809
    %813 = vrot.lane.b32.xlu0 %v811, 96
    %v814 = vpop.permute.xlu0 %813
    %v815 = vrot.slane %v672, 3
    %v817 = vsel %vm71, %v814, 0
    %819 = vmatpush.msra.mxu0 0.0
    %820 = vmatpush.msra.mxu0 0.0
    %821 = vmatpush.msra.mxu0 0.0
    %822 = vmatpush.msra.mxu0 0.0
    %823 = vmatpush.msra.mxu0 0.0
    %824 = vmatpush.msra.mxu0 0.0
    %825 = vmatpush.msra.mxu0 0.0
    %826 = vmatpush.msra.mxu0 0.0
    %827 = vmatpush.msra.mxu0 0.0
    %828 = vmatpush.msra.mxu0 0.0
    %829 = vmatpush.msra.mxu0 0.0
    %830 = vmatpush.msra.mxu0 0.0
    %831 = vmatpush.msra.mxu0 %v62
    %832 = vmatpush.msra.mxu0 %v61
    %833 = vmatpush.msra.mxu0 %v60
    %834 = vmatpush.msra.mxu0 %v59
    %835 = vmatmul.f32.gmra.mxu0 %v817
    %v836 = vpop.f32.mrf.mxu0
    %v837 = vadd.f32 %v815, %v836
    %838 = vdwg.mxu0
    %v839 = vtanh.pop %v837
    %v840 = vmul.f32 %v839, %v66
    %v841 = vadd.f32 %v840, %v67
    %v842 = vmul.f32 %v841, %v805
    %844 = vrot.lane.b32.xlu0 %v841, 96
    %v845 = vpop.permute.xlu0 %844
    %v847 = vmul.f32 %v841, %v845
    %849 = vrot.lane.b32.xlu0 %v847, 64
    %v850 = vpop.permute.xlu0 %849
    %v852 = vadd.f32 %v842, %v850
    %v853 = vtanh.pop %v852
    %855 = vrot.lane.b32.xlu0 %v853, 32
    %v856 = vpop.permute.xlu0 %855
    %v858 = vmul.f32 %v841, %v856
    %860 = vrot.lane.b32.xlu0 %v811, 32
    %v861 = vpop.permute.xlu0 %860
    %864 = vrot.lane.b32.xlu0 %v858, 64
    %v865 = vpop.permute.xlu0 %864
    %v867 = vsel %vm71, %v719, %v764
    %v868 = vsel %vm266, %v867, %v861
    %v869 = vsel %vm268, %v868, %v865
    %870 = vst [vmem:[#allocation9 + $0x3] sm:$0x1] %v869
    %871 = vrot.lane.b32.xlu0 %v858, 96
    %v872 = vpop.permute.xlu0 %871
    %vm874 = vcmask 253952
    %875 = vst.msk [vmem:[#allocation2] sm:$0x1] %vm874, %v872
    %876 = vst.msk [vmem:[#allocation3] sm:$0x1] %vm874, %v852
    // Predicated region
    $region30: #{tpu_custom_call.1} parent=1 // pred_check
      _
    $region31: #{tpu_custom_call.1} parent=1 // pred_check_branch
      %878 = sbr.rel (0) target = $region33
    $region32: #{tpu_custom_call.1} parent=1 // pred_region
      %880 = vsyncadd [#allocation6], 0
      %s882 = sshll.u32 [#allocation9], 4
      %s883 = int_to_ptr.vmem [resolvable:$true] %s882
      %s884 = sshll.u32 %s4, 4
      %s885 = int_to_ptr.hbm [resolvable:$true] %s884
      %887 = dma.vmem_to_hbm [thread:$0]  %s883, 64, %s885, [#allocation6]
    $region33: #{tpu_custom_call.1} parent=1 // pred_fallthru
      _
    // Predicated region
    $region34: #{tpu_custom_call.1} parent=1 // pred_check
      _
    $region35: #{tpu_custom_call.1} parent=1 // pred_check_branch
      %889 = sbr.rel (0) target = $region37
    $region36: #{tpu_custom_call.1} parent=1 // pred_region
      %891 = dma.done [#allocation6], 64
    $region37: #{tpu_custom_call.1} parent=1 // pred_fallthru
      _
    %892 = vsyncpa [#allocation5], 1
    %893 = vsyncpa [#allocation8], 1
    %894 = vsyncpa [#allocation6], 1

</llo_original>
